<compile_context>
chip_gen: v7x
topology: tpu7x:2x2x1
jax: 0.10.0
libtpu: 0.0.40
codegen_flags: <defaults>
</compile_context>

<pallas_src>
import functools
import math

import jax
import jax.numpy as jnp
from jax.experimental import pallas as pl
from jax.experimental.pallas import tpu as pltpu

_MASKED = -1e30  # finite "minus infinity": exp underflows to exactly 0, no inf-inf NaNs


def _attn_pool_kernel(x_ref, mask_ref, qw_ref, allm_ref, o_ref,
                      m_sc, l_sc, acc_sc, *, seq_len, needs_pad):
    si = pl.program_id(1)
    ns = pl.num_programs(1)

    @pl.when(si == 0)
    def _init():
        m_sc[...] = jnp.full_like(m_sc, _MASKED)
        l_sc[...] = jnp.zeros_like(l_sc)
        acc_sc[...] = jnp.zeros_like(acc_sc)

    x = x_ref[...]                        # (tb, ts, E) f32 token embeddings
    m = mask_ref[...]                     # (tb, 1, ts) int32, nonzero = masked out
    qw = qw_ref[...]                      # (tb, 1, E)  f32 folded query
    allm = allm_ref[...] > 0              # (tb, 1, 1)  row fully masked?

    tb, ts, E = x.shape

    if needs_pad:
        # Last sequence tile is padded: positions >= seq_len are invalid.
        pos_l = si * ts + jax.lax.broadcasted_iota(jnp.int32, (1, 1, ts), 2)
        valid = pos_l < seq_len                                   # (1, 1, ts)
        pos_s = si * ts + jax.lax.broadcasted_iota(jnp.int32, (1, ts, 1), 1)
        x = jnp.where(pos_s < seq_len, x, 0.0)  # keep VMEM garbage out of the pool

    # scores[b, 0, s] = <qw[b], x[b, s, :]>   (MXU, flash-attention einsum pattern)
    scores = jnp.einsum("bqe,bse->bqs", qw, x,
                        preferred_element_type=jnp.float32)       # (tb, 1, ts)

    if needs_pad:
        bad = jnp.logical_or(m > 0, jnp.logical_not(valid))
        scores = jnp.where(bad, _MASKED, scores)
        scores = jnp.where(jnp.logical_and(allm, valid), 1.0, scores)
    else:
        scores = jnp.where(m > 0, _MASKED, scores)
        scores = jnp.where(allm, 1.0, scores)  # fully-masked row -> uniform attention

    # Flash-style online softmax over the sequence (lane) axis.
    m_prev = m_sc[...].reshape(tb, 1, 1)
    m_new = jnp.maximum(m_prev, jnp.max(scores, axis=-1, keepdims=True))
    alpha = jnp.exp(m_prev - m_new)                                # (tb, 1, 1)
    p = jnp.exp(scores - m_new)                                    # (tb, 1, ts) EUP
    row_sum = jnp.sum(p, axis=-1, keepdims=True)                   # (tb, 1, 1)

    alpha2 = alpha.reshape(tb, 1)
    l_sc[...] = alpha2 * l_sc[...] + row_sum.reshape(tb, 1)
    # weighted-pool contribution on the MXU: (1, ts) @ (ts, E) per batch row
    contrib = jnp.einsum("bqs,bse->bqe", p, x,
                         preferred_element_type=jnp.float32)       # (tb, 1, E)
    acc_sc[...] = alpha2 * acc_sc[...] + contrib.reshape(tb, E)
    m_sc[...] = m_new.reshape(tb, 1)

    @pl.when(si == ns - 1)
    def _finalize():
        denom = l_sc[...]                                          # (tb, 1), >= 1
        inv = pl.reciprocal(denom, approx=True)                    # EUP slot
        inv = inv * (2.0 - denom * inv)                            # Newton -> ~f32
        o_ref[...] = (acc_sc[...] * inv).reshape(o_ref.shape).astype(o_ref.dtype)


def _pick_tiles(B, S, E, itemsize=4, tile_bytes=2 << 20, target_steps=8):
    """(batch_tile, seq_tile): ~tile_bytes x-tiles, enough grid steps, VMEM-safe."""
    row_bytes = max(1, S * E * itemsize)
    if row_bytes <= tile_bytes:
        ts = S
        tb = max(1, min(B, tile_bytes // row_bytes, 256))
        # keep >= min(B, target_steps) steps on the (parallel, megacore-sharded) batch axis
        nb_target = max(1, min(B, target_steps))
        tb = min(tb, -(-B // nb_target))
    else:
        # A single row exceeds the budget: stream the sequence flash-style.
        tb = 1
        if S > 128:
            ts = (tile_bytes // (E * itemsize)) // 128 * 128
            ts = max(128, min(ts, (S // 128) * 128))  # multiple of 128 (mask lane tiling)
        else:
            ts = S
    return tb, ts


def cross_attention_pooling_expert(x, mask, query, wq, wk, *, tile_bytes=2 << 20):
    """
    x:     (B, S, E) token embeddings
    mask:  (B, S) bool, True = masked out (padding)
    query: (B, 1, Q)
    wq:    (E, Q) query_proj.weight (PyTorch Linear layout, bias=False)
    wk:    (E, E) key_proj.weight   (PyTorch Linear layout, bias=False)
    returns (B, E) float32
    """
    B, S, E = x.shape
    Q = query.shape[-1]

    x = x.astype(jnp.float32)
    q2 = query.reshape(B, Q).astype(jnp.float32)
    wq = wq.astype(jnp.float32)
    wk = wk.astype(jnp.float32)

    # Fold both bias-free projections into one per-row query vector:
    #   scores[b, s] = <x[b, s, :], qw[b, :]>,  qw = query @ Wq.T @ Wk
    if B >= Q:
        wc = jnp.dot(wq.T, wk, preferred_element_type=jnp.float32)    # (Q, E)
        qw = jnp.dot(q2, wc, preferred_element_type=jnp.float32)      # (B, E)
    else:
        qp = jnp.dot(q2, wq.T, preferred_element_type=jnp.float32)    # (B, E)
        qw = jnp.dot(qp, wk, preferred_element_type=jnp.float32)      # (B, E)
    qw = qw.reshape(B, 1, E)

    mask_i = mask.astype(jnp.int32).reshape(B, 1, S)
    allm = jnp.all(mask, axis=1).astype(jnp.int32).reshape(B, 1, 1)

    tb, ts = _pick_tiles(B, S, E, tile_bytes=tile_bytes)
    nb, ns = pl.cdiv(B, tb), pl.cdiv(S, ts)
    needs_pad = (S % ts) != 0

    x_tile_bytes = tb * ts * E * 4
    vmem_limit = int(min(48 << 20, max(24 << 20, 6 * x_tile_bytes)))

    kernel = functools.partial(_attn_pool_kernel, seq_len=S, needs_pad=needs_pad)

    # TODO(synk): optionally stream x in bfloat16 (f32 accumulation) for ~2x HBM
    # bandwidth if the accuracy budget allows; kept f32 to match PyTorch numerics.
    out = pl.pallas_call(
        kernel,
        out_shape=jax.ShapeDtypeStruct((B, 1, E), jnp.float32),
        grid_spec=pltpu.PrefetchScalarGridSpec(
            num_scalar_prefetch=0,
            grid=(nb, ns),
            in_specs=[
                pl.BlockSpec((tb, ts, E), lambda b, s: (b, s, 0)),   # x (streamed)
                pl.BlockSpec((tb, 1, ts), lambda b, s: (b, 0, s)),   # padding mask
                pl.BlockSpec((tb, 1, E), lambda b, s: (b, 0, 0)),    # folded query
                pl.BlockSpec((tb, 1, 1), lambda b, s: (b, 0, 0)),    # all-masked flag
            ],
            out_specs=pl.BlockSpec((tb, 1, E), lambda b, s: (b, 0, 0)),
            scratch_shapes=[
                pltpu.VMEM((tb, 1), jnp.float32),   # running max
                pltpu.VMEM((tb, 1), jnp.float32),   # running softmax denominator
                pltpu.VMEM((tb, E), jnp.float32),   # running weighted sum
            ],
        ),
        compiler_params=pltpu.CompilerParams(
            dimension_semantics=("parallel", "arbitrary"),
            vmem_limit_bytes=vmem_limit,
        ),
    )(x, mask_i, qw, allm)
    return out.reshape(B, E)


def reference(x, mask, query, wq, wk):
    qp = jnp.einsum("boq,eq->boe", query, wq)          # query_proj (bias=False)
    keys = jnp.einsum("bse,fe->bsf", x, wk)            # key_proj   (bias=False)
    scores = jnp.einsum("boe,bse->bs", qp, keys)       # matmul + squeeze(1)
    scores = jnp.where(mask, -jnp.inf, scores)
    all_m = jnp.all(mask, axis=1, keepdims=True)
    scores = jnp.where(all_m, 1.0, scores)
    attn = jax.nn.softmax(scores, axis=-1)
    return jnp.sum(x * attn[..., None], axis=1)


if __name__ == "__main__":
    B, S, E, Q = 2, 8, 32, 16
    key = jax.random.PRNGKey(0)
    k_x, k_q, k_wq, k_wk, k_x2, k_m2 = jax.random.split(key, 6)

    x = jax.random.normal(k_x, (B, S, E), dtype=jnp.float32)
    query = jax.random.normal(k_q, (B, 1, Q), dtype=jnp.float32)

    # xavier_normal_ init, as in the module's __init__
    wq = jax.random.normal(k_wq, (E, Q), dtype=jnp.float32) * math.sqrt(2.0 / (E + Q))
    wk = jax.random.normal(k_wk, (E, E), dtype=jnp.float32) * math.sqrt(2.0 / (E + E))

    # batch 0 partially masked, batch 1 fully masked (exercises the uniform-pool path)
    mask = jnp.zeros((B, S), dtype=bool)
    mask = mask.at[0, S // 2:].set(True)
    mask = mask.at[1, :].set(True)

    out = jax.block_until_ready(cross_attention_pooling_expert(x, mask, query, wq, wk))
    ref = reference(x, mask, query, wq, wk)
    assert out.shape == (B, E)
    assert jnp.allclose(out, ref, atol=1e-3, rtol=1e-3), (out, ref)

    # Second (still small) config: forces the S-tiled flash-style path with a padded
    # tail tile, exercising the online-softmax accumulator and validity masking.
    S2 = 200
    x2 = jax.random.normal(k_x2, (B, S2, E), dtype=jnp.float32)
    mask2 = jax.random.bernoulli(k_m2, 0.3, (B, S2))
    mask2 = mask2.at[1, :].set(True)
    out2 = jax.block_until_ready(
        cross_attention_pooling_expert(x2, mask2, query, wq, wk, tile_bytes=16 << 10))
    ref2 = reference(x2, mask2, query, wq, wk)
    assert out2.shape == (B, E)
    assert jnp.allclose(out2, ref2, atol=1e-3, rtol=1e-3), (out2, ref2)

    print("KERNEL_OK")
</pallas_src>

<mosaic_0001>
module attributes {stable_mosaic.version = 11 : i64} {
  func.func @_attn_pool_kernel(%arg0: i32, %arg1: i32, %arg2: memref<1x8x32xf32, #tpu.memory_space<vmem>>, %arg3: memref<1x1x8xi32, #tpu.memory_space<vmem>>, %arg4: memref<1x1x32xf32, #tpu.memory_space<vmem>>, %arg5: memref<1x1x1xi32, #tpu.memory_space<vmem>>, %arg6: memref<1x1x32xf32, #tpu.memory_space<vmem>>, %arg7: memref<1x1xf32, #tpu.memory_space<vmem>>, %arg8: memref<1x1xf32, #tpu.memory_space<vmem>>, %arg9: memref<1x32xf32, #tpu.memory_space<vmem>>) attributes {dimension_semantics = [#tpu.dimension_semantics<parallel>, #tpu.dimension_semantics<arbitrary>], iteration_bounds = array<i64: 2, 1>, scalar_prefetch = 0 : i64, scratch_operands = 3 : i64, tpu.core_type = #tpu.core_type<tc>, window_params = [{transform_indices = @transform_0, window_bounds = array<i64: 1, 8, 32>}, {transform_indices = @transform_1, window_bounds = array<i64: 1, 1, 8>}, {transform_indices = @transform_2, window_bounds = array<i64: 1, 1, 32>}, {transform_indices = @transform_3, window_bounds = array<i64: 1, 1, 1>}, {transform_indices = @transform_4, window_bounds = array<i64: 1, 1, 32>}]} {
    %c0_i32 = arith.constant 0 : i32
    %0 = arith.cmpi eq, %arg1, %c0_i32 : i32
    %1 = arith.extui %0 : i1 to i32
    %c0_i32_0 = arith.constant 0 : i32
    %2 = arith.cmpi ne, %1, %c0_i32_0 : i32
    scf.if %2 {
      %cst_33 = arith.constant -1.000000e+30 : f32
      %48 = vector.broadcast %cst_33 : f32 to vector<1x1xf32>
      %c0_34 = arith.constant 0 : index
      %c0_35 = arith.constant 0 : index
      %49 = vector.load %arg7[%c0_34, %c0_35] : memref<1x1xf32, #tpu.memory_space<vmem>>, vector<1x1xf32>
      tpu.vector_store %arg7[%c0_34, %c0_35], %48 {strides = array<i32>} : memref<1x1xf32, #tpu.memory_space<vmem>>, vector<1x1xf32>,
      %cst_36 = arith.constant 0.000000e+00 : f32
      %50 = vector.broadcast %cst_36 : f32 to vector<1x1xf32>
      %c0_37 = arith.constant 0 : index
      %c0_38 = arith.constant 0 : index
      %51 = vector.load %arg8[%c0_37, %c0_38] : memref<1x1xf32, #tpu.memory_space<vmem>>, vector<1x1xf32>
      tpu.vector_store %arg8[%c0_37, %c0_38], %50 {strides = array<i32>} : memref<1x1xf32, #tpu.memory_space<vmem>>, vector<1x1xf32>,
      %cst_39 = arith.constant 0.000000e+00 : f32
      %52 = vector.broadcast %cst_39 : f32 to vector<1x32xf32>
      %c0_40 = arith.constant 0 : index
      %c0_41 = arith.constant 0 : index
      %53 = vector.load %arg9[%c0_40, %c0_41] : memref<1x32xf32, #tpu.memory_space<vmem>>, vector<1x32xf32>
      tpu.vector_store %arg9[%c0_40, %c0_41], %52 {strides = array<i32>} : memref<1x32xf32, #tpu.memory_space<vmem>>, vector<1x32xf32>,
    } else {
    }
    %c0 = arith.constant 0 : index
    %c0_1 = arith.constant 0 : index
    %c0_2 = arith.constant 0 : index
    %3 = vector.load %arg2[%c0, %c0_1, %c0_2] : memref<1x8x32xf32, #tpu.memory_space<vmem>>, vector<1x8x32xf32>
    %c0_3 = arith.constant 0 : index
    %c0_4 = arith.constant 0 : index
    %c0_5 = arith.constant 0 : index
    %4 = vector.load %arg3[%c0_3, %c0_4, %c0_5] : memref<1x1x8xi32, #tpu.memory_space<vmem>>, vector<1x1x8xi32>
    %c0_6 = arith.constant 0 : index
    %c0_7 = arith.constant 0 : index
    %c0_8 = arith.constant 0 : index
    %5 = vector.load %arg4[%c0_6, %c0_7, %c0_8] : memref<1x1x32xf32, #tpu.memory_space<vmem>>, vector<1x1x32xf32>
    %c0_9 = arith.constant 0 : index
    %c0_10 = arith.constant 0 : index
    %c0_11 = arith.constant 0 : index
    %6 = vector.load %arg5[%c0_9, %c0_10, %c0_11] : memref<1x1x1xi32, #tpu.memory_space<vmem>>, vector<1x1x1xi32>
    %c0_i32_12 = arith.constant 0 : i32
    %7 = vector.broadcast %c0_i32_12 : i32 to vector<1x1x1xi32>
    %8 = arith.cmpi sgt, %6, %7 : vector<1x1x1xi32>
    "tpu.trace_start"() <{level = 10 : i32, message = "bqe,bse->bqs"}> : () -> ()
    %cst = arith.constant dense<0.000000e+00> : vector<1x1x8xf32>
    %9 = tpu.matmul %5, %3, %cst {dimension_numbers = #tpu.dot_dimension_numbers<[2], [2], [1], [1], [0, 0, 0, 1, 1, 1], [0], [0]>} : vector<1x1x32xf32>, vector<1x8x32xf32>, vector<1x1x8xf32> -> vector<1x1x8xf32>
    %c0_i32_13 = arith.constant 0 : i32
    "tpu.trace_stop"() : () -> ()
    %10 = vector.broadcast %c0_i32_13 : i32 to vector<1x1x8xi32>
    %11 = arith.cmpi sgt, %4, %10 : vector<1x1x8xi32>
    %cst_14 = arith.constant -1.000000e+30 : f32
    %12 = vector.broadcast %cst_14 : f32 to vector<1x1x8xf32>
    %13 = arith.select %11, %12, %9 : vector<1x1x8xi1>, vector<1x1x8xf32>
    %cst_15 = arith.constant 1.000000e+00 : f32
    %14 = vector.shape_cast %8 : vector<1x1x1xi1> to vector<1x1x1xi1>
    %15 = vector.broadcast %14 : vector<1x1x1xi1> to vector<1x1x8xi1>
    %16 = vector.broadcast %cst_15 : f32 to vector<1x1x8xf32>
    %17 = arith.select %15, %16, %13 : vector<1x1x8xi1>, vector<1x1x8xf32>
    %c0_16 = arith.constant 0 : index
    %c0_17 = arith.constant 0 : index
    %18 = vector.load %arg7[%c0_16, %c0_17] : memref<1x1xf32, #tpu.memory_space<vmem>>, vector<1x1xf32>
    %19 = vector.shape_cast %18 : vector<1x1xf32> to vector<1x1x1xf32>
    %cst_18 = arith.constant dense<0xFF800000> : vector<1x1xf32>
    %20 = vector.multi_reduction <maximumf>, %17, %cst_18 [2] : vector<1x1x8xf32> to vector<1x1xf32>
    %21 = vector.shape_cast %20 : vector<1x1xf32> to vector<1x1x1xf32>
    %22 = arith.maximumf %19, %21 : vector<1x1x1xf32>
    %23 = arith.subf %19, %22 : vector<1x1x1xf32>
    %24 = math.exp %23 : vector<1x1x1xf32>
    %25 = vector.broadcast %22 : vector<1x1x1xf32> to vector<1x1x8xf32>
    %26 = arith.subf %17, %25 : vector<1x1x8xf32>
    %27 = math.exp %26 : vector<1x1x8xf32>
    %cst_19 = arith.constant dense<0.000000e+00> : vector<1x1xf32>
    %28 = vector.multi_reduction <add>, %27, %cst_19 [2] : vector<1x1x8xf32> to vector<1x1xf32>
    %29 = vector.shape_cast %28 : vector<1x1xf32> to vector<1x1x1xf32>
    %30 = vector.shape_cast %24 : vector<1x1x1xf32> to vector<1x1xf32>
    %c0_20 = arith.constant 0 : index
    %c0_21 = arith.constant 0 : index
    %31 = vector.load %arg8[%c0_20, %c0_21] : memref<1x1xf32, #tpu.memory_space<vmem>>, vector<1x1xf32>
    %32 = arith.mulf %30, %31 : vector<1x1xf32>
    %33 = vector.shape_cast %29 : vector<1x1x1xf32> to vector<1x1xf32>
    %34 = arith.addf %32, %33 : vector<1x1xf32>
    %c0_22 = arith.constant 0 : index
    %c0_23 = arith.constant 0 : index
    %35 = vector.load %arg8[%c0_22, %c0_23] : memref<1x1xf32, #tpu.memory_space<vmem>>, vector<1x1xf32>
    tpu.vector_store %arg8[%c0_22, %c0_23], %34 {strides = array<i32>} : memref<1x1xf32, #tpu.memory_space<vmem>>, vector<1x1xf32>,
    "tpu.trace_start"() <{level = 10 : i32, message = "bqs,bse->bqe"}> : () -> ()
    %cst_24 = arith.constant dense<0.000000e+00> : vector<1x1x32xf32>
    %36 = tpu.matmul %27, %3, %cst_24 {dimension_numbers = #tpu.dot_dimension_numbers<[2], [1], [1], [2], [0, 0, 0, 1, 1, 2], [0], [0]>} : vector<1x1x8xf32>, vector<1x8x32xf32>, vector<1x1x32xf32> -> vector<1x1x32xf32>
    "tpu.trace_stop"() : () -> ()
    %c0_25 = arith.constant 0 : index
    %c0_26 = arith.constant 0 : index
    %37 = vector.load %arg9[%c0_25, %c0_26] : memref<1x32xf32, #tpu.memory_space<vmem>>, vector<1x32xf32>
    %38 = vector.broadcast %30 : vector<1x1xf32> to vector<1x32xf32>
    %39 = arith.mulf %38, %37 : vector<1x32xf32>
    %40 = vector.shape_cast %36 : vector<1x1x32xf32> to vector<1x32xf32>
    %41 = arith.addf %39, %40 : vector<1x32xf32>
    %c0_27 = arith.constant 0 : index
    %c0_28 = arith.constant 0 : index
    %42 = vector.load %arg9[%c0_27, %c0_28] : memref<1x32xf32, #tpu.memory_space<vmem>>, vector<1x32xf32>
    tpu.vector_store %arg9[%c0_27, %c0_28], %41 {strides = array<i32>} : memref<1x32xf32, #tpu.memory_space<vmem>>, vector<1x32xf32>,
    %43 = vector.shape_cast %22 : vector<1x1x1xf32> to vector<1x1xf32>
    %c0_29 = arith.constant 0 : index
    %c0_30 = arith.constant 0 : index
    %44 = vector.load %arg7[%c0_29, %c0_30] : memref<1x1xf32, #tpu.memory_space<vmem>>, vector<1x1xf32>
    tpu.vector_store %arg7[%c0_29, %c0_30], %43 {strides = array<i32>} : memref<1x1xf32, #tpu.memory_space<vmem>>, vector<1x1xf32>,
    %c0_i32_31 = arith.constant 0 : i32
    %45 = arith.cmpi eq, %arg1, %c0_i32_31 : i32
    %46 = arith.extui %45 : i1 to i32
    %c0_i32_32 = arith.constant 0 : i32
    %47 = arith.cmpi ne, %46, %c0_i32_32 : i32
    scf.if %47 {
      %c0_33 = arith.constant 0 : index
      %c0_34 = arith.constant 0 : index
      %48 = vector.load %arg8[%c0_33, %c0_34] : memref<1x1xf32, #tpu.memory_space<vmem>>, vector<1x1xf32>
      %49 = tpu.reciprocal %48 {approx = true} : vector<1x1xf32> -> vector<1x1xf32>
      %50 = arith.mulf %48, %49 : vector<1x1xf32>
      %cst_35 = arith.constant 2.000000e+00 : f32
      %51 = vector.broadcast %cst_35 : f32 to vector<1x1xf32>
      %52 = arith.subf %51, %50 : vector<1x1xf32>
      %53 = arith.mulf %49, %52 : vector<1x1xf32>
      %c0_36 = arith.constant 0 : index
      %c0_37 = arith.constant 0 : index
      %54 = vector.load %arg9[%c0_36, %c0_37] : memref<1x32xf32, #tpu.memory_space<vmem>>, vector<1x32xf32>
      %55 = vector.broadcast %53 : vector<1x1xf32> to vector<1x32xf32>
      %56 = arith.mulf %54, %55 : vector<1x32xf32>
      %57 = vector.shape_cast %56 : vector<1x32xf32> to vector<1x1x32xf32>
      %c0_38 = arith.constant 0 : index
      %c0_39 = arith.constant 0 : index
      %c0_40 = arith.constant 0 : index
      %58 = vector.load %arg6[%c0_38, %c0_39, %c0_40] : memref<1x1x32xf32, #tpu.memory_space<vmem>>, vector<1x1x32xf32>
      tpu.vector_store %arg6[%c0_38, %c0_39, %c0_40], %57 {strides = array<i32>} : memref<1x1x32xf32, #tpu.memory_space<vmem>>, vector<1x1x32xf32>,
    } else {
    }
    return
  }
  func.func @transform_0(%arg0: i32, %arg1: i32) -> (i32, i32, i32) {
    %c0_i32 = arith.constant 0 : i32
    %c0_i32_0 = arith.constant 0 : i32
    return %arg0, %arg1, %c0_i32 : i32, i32, i32
  }
  func.func @transform_1(%arg0: i32, %arg1: i32) -> (i32, i32, i32) {
    %c0_i32 = arith.constant 0 : i32
    %c0_i32_0 = arith.constant 0 : i32
    return %arg0, %c0_i32, %arg1 : i32, i32, i32
  }
  func.func @transform_2(%arg0: i32, %arg1: i32) -> (i32, i32, i32) {
    %c0_i32 = arith.constant 0 : i32
    %c0_i32_0 = arith.constant 0 : i32
    %c0_i32_1 = arith.constant 0 : i32
    return %arg0, %c0_i32, %c0_i32_0 : i32, i32, i32
  }
  func.func @transform_3(%arg0: i32, %arg1: i32) -> (i32, i32, i32) {
    %c0_i32 = arith.constant 0 : i32
    %c0_i32_0 = arith.constant 0 : i32
    %c0_i32_1 = arith.constant 0 : i32
    return %arg0, %c0_i32, %c0_i32_0 : i32, i32, i32
  }
  func.func @transform_4(%arg0: i32, %arg1: i32) -> (i32, i32, i32) {
    %c0_i32 = arith.constant 0 : i32
    %c0_i32_0 = arith.constant 0 : i32
    %c0_i32_1 = arith.constant 0 : i32
    return %arg0, %c0_i32, %c0_i32_0 : i32, i32, i32
  }
}

</mosaic_0001>

<llo_original>
// kernel: tpu_custom_call.1
$region0: #{tpu_custom_call.1}
  #allocation0 [shape = 'u32[]', space=smem, size = 0x4, offset = 0x4, fixed_abs, tag = 'smem constant byte address 0x4 - core index']
  #allocation1 [shape = 'u32[144,128]{1,0:T(1,128)}', space=vmem, size = 0x12000, scoped, tag = 'internal scratch']
  #allocation2 [shape = 'f32[1,1]{1,0:T(1,128)}', space=vmem, size = 0x200, scoped, tag = 'scratch operand']
  #allocation3 [shape = 'f32[1,1]{1,0:T(1,128)}', space=vmem, size = 0x200, scoped, tag = 'scratch operand']
  #allocation4 [shape = 'f32[1,32]{1,0:T(1,128)}', space=vmem, size = 0x200, scoped, tag = 'scratch operand']
  %s0 = inlined_call_operand.hbm [shape: f32[2,8,32], index: 0, kind: input, shape index: {}]
  %s1 = inlined_call_operand.vmem [shape: s32[2,1,8], index: 1, kind: input, shape index: {}]
  %s2 = inlined_call_operand.vmem [shape: f32[2,1,32], index: 2, kind: input, shape index: {}]
  %s3 = inlined_call_operand.vmem [shape: s32[2,1,1], index: 3, kind: input, shape index: {}]
  %s4 = inlined_call_operand.hbm [shape: f32[2,1,32], index: 4, kind: output, shape index: {}]
  %s5 = sld [smem:[#allocation0]]
  $region61: #{tpu_custom_call.1} parent=0
    _
  %s7 = ssub.s32 1, %s5
  %s8 = scalar_select 0, %s7, %s5
  $region1: #{tpu_custom_call.1} parent=0
    #allocation5 [shape = 'u8[8192]{0}', space=vmem, size = 0x2000, scoped, tag = 'input window, operand 0']
    #allocation6 [shape = 's32[2]{0}', space=sflag, size = 0x8, scoped, tag = 'scoped memory for tpu_custom_call.1']
    #allocation7 [shape = 's32[2]{0}', space=sflag, size = 0x8, scoped, tag = 'scoped memory for tpu_custom_call.1']
    #allocation8 [shape = 'u8[1024]{0}', space=vmem, size = 0x400, scoped, tag = 'output window, operand 0']
    %9 = vsyncpa [#allocation6], 0
    %s10 = scalar_lea.sflag [#allocation6], 1
    %11 = vsyncpa %s10, 0
    %12 = vsyncpa [#allocation7], 0
    %s13 = scalar_lea.sflag [#allocation7], 1
    %14 = vsyncpa %s13, 0
    loop: start=0, step=1, limit=4
    $region2: #{tpu_custom_call.1} parent=1 // loop_pre_header
      _
    $region3: #{tpu_custom_call.1} parent=1 // loop_header
      %s16 = sphi 0, %s20
      %p17 = scmp.ge.s32.totalorder %s16, 4
      %s23 = sphi 0, %s35
      %s24 = sphi 0, %s31
      %s25 = sphi 0, %s23
      %s26 = sphi 0, %s24
      %s27 = sphi 0, %s25
      %s28 = sphi 0, %s26
      %s40 = sphi 0, %s42
      %s43 = sphi 0, %s40
      %s44 = sphi 0, %s43
      %s60 = sphi 0, %s44
      %s68 = sphi 0, %s70
      %s71 = sphi 0, %s68
      %s72 = sphi 0, %s71
      %s88 = sphi 0, %s72
      %s94 = sphi 0, %s96
      %s97 = sphi 0, %s94
      %s98 = sphi 0, %s97
      %s114 = sphi 0, %s98
      %s120 = sphi 0, %s122
      %s123 = sphi 0, %s120
      %s124 = sphi 0, %s123
      %s140 = sphi 0, %s124
      %s146 = sphi 0, %s148
      %s149 = sphi 0, %s146
      %s150 = sphi 0, %s149
      %s166 = sphi 0, %s150
    $region4: #{tpu_custom_call.1} parent=1 // loop_header_branch
      %19 = sbr.rel (%p17) target = $region8
    $region5: #{tpu_custom_call.1} parent=1 // loop_body
      %s21 = ssub.s32 %s16, 1
      %s22 = ssub.s32 %s16, 2
      %s29 = sadd.s32 1, %s24
      %p30 = scmp.ge.s32.totalorder %s29, 1
      %s31 = scalar_select %p30, 0, %s29
      %s32 = sadd.s32 1, %s23
      %s33 = scalar_select %p30, %s32, %s23
      %p34 = scmp.ge.s32.totalorder %s33, 2
      %s35 = scalar_select %p34, 0, %s33
      %s36 = ssub.s32 %s23, %s35
      %s37 = ssub.s32 %s24, %s31
      %s38 = sor.u32 %s36, %s37
      %p39 = scmp.eq.s32.totalorder %s38, 0
      %s41 = sadd.s32 %s40, 1
      %s42 = scalar_select %p39, %s40, %s41
      %p45 = pneg %p39
      %p46 = scmp.eq.s32.totalorder %s16, 1
      %p47 = por %p45, %p46
      %p48 = scmp.ne.s32.totalorder %s40, %s43
      %p49 = scmp.eq.s32.totalorder %s16, 0
      %p50 = por %p48, %p49
      %p51 = scmp.ne.s32.totalorder %s40, %s43
      %p52 = scmp.eq.s32.totalorder %s21, 1
      %p53 = por %p51, %p52
      %p54 = scmp.ne.s32.totalorder %s43, %s44
      %p55 = scmp.eq.s32.totalorder %s21, 0
      %p56 = por %p54, %p55
      %p57 = scmp.ne.s32.totalorder %s43, %s44
      %p58 = scmp.eq.s32.totalorder %s22, 1
      %p59 = por %p57, %p58
      %p61 = scmp.ne.s32.totalorder %s44, %s60
      %p62 = scmp.eq.s32.totalorder %s22, 0
      %p63 = por %p61, %p62
      %s64 = ssub.s32 %s23, %s35
      %s65 = ssub.s32 %s24, %s31
      %s66 = sor.u32 %s64, %s65
      %p67 = scmp.eq.s32.totalorder %s66, 0
      %s69 = sadd.s32 %s68, 1
      %s70 = scalar_select %p67, %s68, %s69
      %p73 = pneg %p67
      %p74 = scmp.eq.s32.totalorder %s16, 1
      %p75 = por %p73, %p74
      %p76 = scmp.ne.s32.totalorder %s68, %s71
      %p77 = scmp.eq.s32.totalorder %s16, 0
      %p78 = por %p76, %p77
      %p79 = scmp.ne.s32.totalorder %s68, %s71
      %p80 = scmp.eq.s32.totalorder %s21, 1
      %p81 = por %p79, %p80
      %p82 = scmp.ne.s32.totalorder %s71, %s72
      %p83 = scmp.eq.s32.totalorder %s21, 0
      %p84 = por %p82, %p83
      %p85 = scmp.ne.s32.totalorder %s71, %s72
      %p86 = scmp.eq.s32.totalorder %s22, 1
      %p87 = por %p85, %p86
      %p89 = scmp.ne.s32.totalorder %s72, %s88
      %p90 = scmp.eq.s32.totalorder %s22, 0
      %p91 = por %p89, %p90
      %s92 = ssub.s32 %s23, %s35
      %p93 = scmp.eq.s32.totalorder %s92, 0
      %s95 = sadd.s32 %s94, 1
      %s96 = scalar_select %p93, %s94, %s95
      %p99 = pneg %p93
      %p100 = scmp.eq.s32.totalorder %s16, 1
      %p101 = por %p99, %p100
      %p102 = scmp.ne.s32.totalorder %s94, %s97
      %p103 = scmp.eq.s32.totalorder %s16, 0
      %p104 = por %p102, %p103
      %p105 = scmp.ne.s32.totalorder %s94, %s97
      %p106 = scmp.eq.s32.totalorder %s21, 1
      %p107 = por %p105, %p106
      %p108 = scmp.ne.s32.totalorder %s97, %s98
      %p109 = scmp.eq.s32.totalorder %s21, 0
      %p110 = por %p108, %p109
      %p111 = scmp.ne.s32.totalorder %s97, %s98
      %p112 = scmp.eq.s32.totalorder %s22, 1
      %p113 = por %p111, %p112
      %p115 = scmp.ne.s32.totalorder %s98, %s114
      %p116 = scmp.eq.s32.totalorder %s22, 0
      %p117 = por %p115, %p116
      %s118 = ssub.s32 %s23, %s35
      %p119 = scmp.eq.s32.totalorder %s118, 0
      %s121 = sadd.s32 %s120, 1
      %s122 = scalar_select %p119, %s120, %s121
      %p125 = pneg %p119
      %p126 = scmp.eq.s32.totalorder %s16, 1
      %p127 = por %p125, %p126
      %p128 = scmp.ne.s32.totalorder %s120, %s123
      %p129 = scmp.eq.s32.totalorder %s16, 0
      %p130 = por %p128, %p129
      %p131 = scmp.ne.s32.totalorder %s120, %s123
      %p132 = scmp.eq.s32.totalorder %s21, 1
      %p133 = por %p131, %p132
      %p134 = scmp.ne.s32.totalorder %s123, %s124
      %p135 = scmp.eq.s32.totalorder %s21, 0
      %p136 = por %p134, %p135
      %p137 = scmp.ne.s32.totalorder %s123, %s124
      %p138 = scmp.eq.s32.totalorder %s22, 1
      %p139 = por %p137, %p138
      %p141 = scmp.ne.s32.totalorder %s124, %s140
      %p142 = scmp.eq.s32.totalorder %s22, 0
      %p143 = por %p141, %p142
      %s144 = ssub.s32 %s23, %s35
      %p145 = scmp.eq.s32.totalorder %s144, 0
      %s147 = sadd.s32 %s146, 1
      %s148 = scalar_select %p145, %s146, %s147
      %p151 = pneg %p145
      %p152 = scmp.eq.s32.totalorder %s16, 1
      %p153 = por %p151, %p152
      %p154 = scmp.ne.s32.totalorder %s146, %s149
      %p155 = scmp.eq.s32.totalorder %s16, 0
      %p156 = por %p154, %p155
      %p157 = scmp.ne.s32.totalorder %s146, %s149
      %p158 = scmp.eq.s32.totalorder %s21, 1
      %p159 = por %p157, %p158
      %p160 = scmp.ne.s32.totalorder %s149, %s150
      %p161 = scmp.eq.s32.totalorder %s21, 0
      %p162 = por %p160, %p161
      %p163 = scmp.ne.s32.totalorder %s149, %s150
      %p164 = scmp.eq.s32.totalorder %s22, 1
      %p165 = por %p163, %p164
      %p167 = scmp.ne.s32.totalorder %s150, %s166
      %p168 = scmp.eq.s32.totalorder %s22, 0
      %p169 = por %p167, %p168
      %p170 = scmp.le.s32.totalorder 1, %s16
      %p171 = scmp.lt.s32.totalorder %s16, 3
      %p172 = pnand %p170, %p171
      %p173 = pneg %p172
      // Predicated region
      $region9: #{tpu_custom_call.1} parent=5 // pred_check
        _
      $region10: #{tpu_custom_call.1} parent=5 // pred_check_branch
        %175 = sbr.rel (%p172) target = $region12
      $region11: #{tpu_custom_call.1} parent=5 // pred_region
        %s176 = ssub.s32 %s16, 1
      $region12: #{tpu_custom_call.1} parent=5 // pred_fallthru
        _
      %p177 = scmp.lt.s32.totalorder %s16, 2
      // Predicated region
      $region13: #{tpu_custom_call.1} parent=5 // pred_check
        %p178 = pneg %p177
      $region14: #{tpu_custom_call.1} parent=5 // pred_check_branch
        %180 = sbr.rel (%p178) target = $region16
      $region15: #{tpu_custom_call.1} parent=5 // pred_region
        // Predicated region
        $region17: #{tpu_custom_call.1} parent=15 // pred_check
          %p181 = pneg %p50
        $region18: #{tpu_custom_call.1} parent=15 // pred_check_branch
          %183 = sbr.rel (%p181) target = $region20
        $region19: #{tpu_custom_call.1} parent=15 // pred_region
          %s184 = sand.u32 %s40, 1
          %s185 = scalar_lea.sflag [#allocation6], %s184
          %s186 = sand.u32 %s40, 1
          %s187 = smul.addr %s186, 8
          %s188 = scalar_lea.vmem [#allocation5], %s187
          %s190 = ssub.s32 128, 128
          %191 = vsyncadd %s185, %s190
          %s192 = sadd.s32 %s24, %s23
          %s193 = smul.addr %s192, 128
          %s194 = scalar_lea.hbm %s0, %s193
          %s196 = sshll.u32 %s188, 4
          %s197 = int_to_ptr.vmem [resolvable:$true] %s196
          %199 = dma.hbm_to_vmem [thread:$0]  %s194, 128, %s197, %s185
        $region20: #{tpu_custom_call.1} parent=15 // pred_fallthru
          _
        // Predicated region
        $region21: #{tpu_custom_call.1} parent=15 // pred_check
          %p200 = pneg %p78
        $region22: #{tpu_custom_call.1} parent=15 // pred_check_branch
          %202 = sbr.rel (%p200) target = $region24
        $region23: #{tpu_custom_call.1} parent=15 // pred_region
          %p203 = scmp.lt.s32.totalorder %s23, 1
          %s204 = scalar_select %p203, %s23, 1
          %p205 = scmp.lt.s32.totalorder %s24, 0
          %s206 = scalar_select %p205, %s24, 0
          %s207 = sadd.s32 %s206, %s204
          %s208 = scalar_lea.vmem %s1, %s207
        $region24: #{tpu_custom_call.1} parent=15 // pred_fallthru
          _
        // Predicated region
        $region25: #{tpu_custom_call.1} parent=15 // pred_check
          %p209 = pneg %p104
        $region26: #{tpu_custom_call.1} parent=15 // pred_check_branch
          %211 = sbr.rel (%p209) target = $region28
        $region27: #{tpu_custom_call.1} parent=15 // pred_region
          %p212 = scmp.lt.s32.totalorder %s23, 1
          %s213 = scalar_select %p212, %s23, 1
          %s214 = scalar_lea.vmem %s2, %s213
        $region28: #{tpu_custom_call.1} parent=15 // pred_fallthru
          _
        // Predicated region
        $region29: #{tpu_custom_call.1} parent=15 // pred_check
          %p215 = pneg %p130
        $region30: #{tpu_custom_call.1} parent=15 // pred_check_branch
          %217 = sbr.rel (%p215) target = $region32
        $region31: #{tpu_custom_call.1} parent=15 // pred_region
          %p218 = scmp.lt.s32.totalorder %s23, 1
          %s219 = scalar_select %p218, %s23, 1
          %s220 = scalar_lea.vmem %s3, %s219
        $region32: #{tpu_custom_call.1} parent=15 // pred_fallthru
          _
      $region16: #{tpu_custom_call.1} parent=5 // pred_fallthru
        _
      %p221 = scmp.le.s32.totalorder 1, %s16
      %p222 = scmp.lt.s32.totalorder %s16, 3
      %p223 = pnand %p221, %p222
      %p224 = pneg %p223
      // Predicated region
      $region33: #{tpu_custom_call.1} parent=5 // pred_check
        _
      $region34: #{tpu_custom_call.1} parent=5 // pred_check_branch
        %226 = sbr.rel (%p223) target = $region36
      $region35: #{tpu_custom_call.1} parent=5 // pred_region
        %s227 = ssub.s32 %s16, 1
        %s228 = sand.u32 %s43, 1
        %s229 = scalar_lea.sflag [#allocation6], %s228
        %s230 = sand.u32 %s43, 1
        %s231 = smul.addr %s230, 8
        %s232 = scalar_lea.vmem [#allocation5], %s231
        // Predicated region
        $region37: #{tpu_custom_call.1} parent=35 // pred_check
          %p233 = pneg %p56
        $region38: #{tpu_custom_call.1} parent=35 // pred_check_branch
          %235 = sbr.rel (%p233) target = $region40
        $region39: #{tpu_custom_call.1} parent=35 // pred_region
          %236 = dma.done %s229, 128
        $region40: #{tpu_custom_call.1} parent=35 // pred_fallthru
          _
        %s237 = sand.u32 %s43, 1
        %s238 = scalar_lea.sflag [#allocation6], %s237
        %s239 = sand.u32 %s43, 1
        %s240 = smul.addr %s239, 8
        %s241 = scalar_lea.vmem [#allocation5], %s240
        %p242 = pneg %p56
        %p243 = pneg %p53
        %p244 = scmp.lt.s32.totalorder %s25, 1
        %s245 = scalar_select %p244, %s25, 1
        %p246 = scmp.lt.s32.totalorder %s26, 0
        %s247 = scalar_select %p246, %s26, 0
        %s248 = sadd.s32 %s247, %s245
        %s249 = scalar_lea.vmem %s1, %s248
        %p250 = pneg %p84
        %p251 = pneg %p81
        %p252 = scmp.lt.s32.totalorder %s25, 1
        %s253 = scalar_select %p252, %s25, 1
        %s254 = scalar_lea.vmem %s2, %s253
        %p255 = pneg %p110
        %p256 = pneg %p107
        %p257 = scmp.lt.s32.totalorder %s25, 1
        %s258 = scalar_select %p257, %s25, 1
        %s259 = scalar_lea.vmem %s3, %s258
        %p260 = pneg %p136
        %p261 = pneg %p133
        %p262 = pneg %p162
        %p263 = pneg %p159
        %s264 = sand.u32 %s149, 1
        %s265 = scalar_lea.sflag [#allocation7], %s264
        %s266 = sand.u32 %s149, 1
        %s267 = scalar_lea.vmem [#allocation8], %s266
        %p268 = scmp.lt.s32.totalorder %s25, 1
        %s269 = scalar_select %p268, %s25, 1
        %p270 = scmp.lt.s32.totalorder %s26, 0
        %s271 = scalar_select %p270, %s26, 0
        %s272 = sadd.s32 %s271, %s269
        %s273 = scalar_lea.vmem %s1, %s272
        %p274 = scmp.lt.s32.totalorder %s25, 1
        %s275 = scalar_select %p274, %s25, 1
        %s276 = scalar_lea.vmem %s2, %s275
        %p277 = scmp.lt.s32.totalorder %s25, 1
        %s278 = scalar_select %p277, %s25, 1
        %s279 = scalar_lea.vmem %s3, %s278
        %p280 = scmp.eq.s32.totalorder %s26, 0
        // Predicated region
        $region41: #{tpu_custom_call.1} parent=35 // pred_check
          %p281 = pneg %p280
        $region42: #{tpu_custom_call.1} parent=35 // pred_check_branch
          %283 = sbr.rel (%p281) target = $region44
        $region43: #{tpu_custom_call.1} parent=35 // pred_region
          %vm284 = vcmask 0
          %285 = vst.msk [vmem:[#allocation2] sm:$0x1] %vm284, -1e+30
          %286 = vst.msk [vmem:[#allocation3] sm:$0x1] %vm284, 0.0
          %vm287 = vcmask 253952
          %288 = vst.msk [vmem:[#allocation4] sm:$0x1] %vm287, 0.0
        $region44: #{tpu_custom_call.1} parent=35 // pred_fallthru
          _
        %v289 = vld [vmem:[%s232] sm:$0xff]
        %v290 = vld [vmem:[%s273] sm:$0x1]
        %v291 = vld [vmem:[%s276] sm:$0x1]
        %v292 = vld [vmem:[%s279] sm:$0x1]
        %vm293 = vcmp.gt.s32.totalorder %v292, 0
        %vm294 = vcmask 261120
        %v296 = vsel %vm294, %v291, 0
        %v299 = vsel %vm294, %v289, 0
        %301 = vmatprep.subr.mxu0 0.0
        %302 = vmatpush1.xpose.msra.mxu0 %v299
        %303 = vmatprep.subr.mxu0 0.0
        %304 = vmatpush1.xpose.msra.mxu0 0.0
        %305 = vmatprep.subr.mxu0 0.0
        %306 = vmatpush1.xpose.msra.mxu0 0.0
        %307 = vmatprep.subr.mxu0 0.0
        %308 = vmatpush1.xpose.msra.mxu0 0.0
        %309 = vmatprep.subr.mxu0 0.0
        %310 = vmatpush1.xpose.msra.mxu0 0.0
        %311 = vmatprep.subr.mxu0 0.0
        %312 = vmatpush1.xpose.msra.mxu0 0.0
        %313 = vmatprep.subr.mxu0 0.0
        %314 = vmatpush1.xpose.msra.mxu0 0.0
        %315 = vmatprep.subr.mxu0 0.0
        %316 = vmatpush1.xpose.msra.mxu0 0.0
        %317 = vmatprep.subr.mxu0 0.0
        %318 = vmatpush1.xpose.msra.mxu0 0.0
        %319 = vmatprep.subr.mxu0 0.0
        %320 = vmatpush1.xpose.msra.mxu0 0.0
        %321 = vmatprep.subr.mxu0 0.0
        %322 = vmatpush1.xpose.msra.mxu0 0.0
        %323 = vmatprep.subr.mxu0 0.0
        %324 = vmatpush1.xpose.msra.mxu0 0.0
        %325 = vmatprep.subr.mxu0 0.0
        %326 = vmatpush1.xpose.msra.mxu0 0.0
        %327 = vmatprep.subr.mxu0 0.0
        %328 = vmatpush1.xpose.msra.mxu0 0.0
        %329 = vmatprep.subr.mxu0 0.0
        %330 = vmatpush1.xpose.msra.mxu0 0.0
        %331 = vmatprep.subr.mxu0 0.0
        %332 = vmatpush1.xpose.msra.mxu0 0.0
        %333 = vmatprep.subr.mxu0 0.0
        %334 = vmatpush1.xpose.msra.mxu0 0.0
        %335 = vmatprep.subr.mxu0 0.0
        %336 = vmatpush1.xpose.msra.mxu0 0.0
        %337 = vmatprep.subr.mxu0 0.0
        %338 = vmatpush1.xpose.msra.mxu0 0.0
        %339 = vmatprep.subr.mxu0 0.0
        %340 = vmatpush1.xpose.msra.mxu0 0.0
        %341 = vmatprep.subr.mxu0 0.0
        %342 = vmatpush1.xpose.msra.mxu0 0.0
        %343 = vmatprep.subr.mxu0 0.0
        %344 = vmatpush1.xpose.msra.mxu0 0.0
        %345 = vmatprep.subr.mxu0 0.0
        %346 = vmatpush1.xpose.msra.mxu0 0.0
        %347 = vmatprep.subr.mxu0 0.0
        %348 = vmatpush1.xpose.msra.mxu0 0.0
        %349 = vmatprep.subr.mxu0 0.0
        %350 = vmatpush1.xpose.msra.mxu0 0.0
        %351 = vmatprep.subr.mxu0 0.0
        %352 = vmatpush1.xpose.msra.mxu0 0.0
        %353 = vmatprep.subr.mxu0 0.0
        %354 = vmatpush1.xpose.msra.mxu0 0.0
        %355 = vmatprep.subr.mxu0 0.0
        %356 = vmatpush1.xpose.msra.mxu0 0.0
        %357 = vmatprep.subr.mxu0 0.0
        %358 = vmatpush1.xpose.msra.mxu0 0.0
        %359 = vmatprep.subr.mxu0 0.0
        %360 = vmatpush1.xpose.msra.mxu0 0.0
        %361 = vmatprep.subr.mxu0 0.0
        %362 = vmatpush1.xpose.msra.mxu0 0.0
        %363 = vmatprep.subr.mxu0 0.0
        %364 = vmatpush1.xpose.msra.mxu0 0.0
        %365 = vmatprep.mubr.f32.mxu0 0.0
        %366 = vmatmul.mubr.f32.gmra.mrb[0].mxu0 %v296
        %v367 = vpop.f32.mrb[0].mxu0
        %v368 = vadd.f32 0.0, %v367
        %v369 = vpop.f32.mrb[0].mxu0
        %370 = vdwg.mxu0
        %vm371 = vcmp.gt.s32.totalorder %v290, 0
        %v372 = vsel %vm371, -1e+30, %v368
        %v373 = vsel %vm293, 1, 0
        %374 = vset.pattern.permute.xlu0 0
        %375 = vperm.xlu0 %374, %v373
        %v376 = vpop.permute.xlu0 %375
        %v377 = vlaneseq
        %v378 = vshrl.u32 %v377, 7
        %v379 = vsub.s32 0, %v378
        %v380 = vrot.slane %v376, %v379
        %vm381 = vcmp.eq.s32.totalorder %v380, 1
        %v382 = vsel %vm381, 1.0, %v372
        %v383 = vld [vmem:[#allocation2] sm:$0x1]
        %vm384 = vcmask 57344
        %v385 = vsel %vm384, %v382, -inf
        %386 = vmax.xlane.f32.xlu0 %v385
        %v387 = vpop.xlane.xlu0 %386
        %v388 = vmax.f32 %v383, %v387
        %v389 = vsub.f32 %v383, %v388
        %v390 = vmul.f32 %v389, 1.442695
        %v391 = vpow.pop %v390
        %393 = vset.pattern.permute.xlu0 0
        %394 = vperm.xlu0 %393, %v388
        %v395 = vpop.permute.xlu0 %394
        %v397 = vlaneseq
        %v398 = vshrl.u32 %v397, 7
        %v399 = vsub.s32 0, %v398
        %v400 = vrot.slane %v395, %v399
        %v401 = vsub.f32 %v382, %v400
        %v402 = vmul.f32 %v401, 1.442695
        %v403 = vpow.pop %v402
        %v404 = vsel %vm384, %v403, 0.0
        %405 = vadd.xlane.f32.xlu0 %v404
        %v406 = vpop.xlane.xlu0 %405
        %v407 = vld [vmem:[#allocation3] sm:$0x1]
        %v408 = vmul.f32 %v391, %v407
        %v409 = vadd.f32 %v408, %v406
        %vm410 = vcmask 0
        %411 = vst.msk [vmem:[#allocation3] sm:$0x1] %vm410, %v409
        %vm412 = vcmask 64512
        %v414 = vsel %vm412, %v403, 0
        %416 = vmatprep.subr.mxu0 0.0
        %417 = vmatpush1.msra.mxu0 %v289
        %418 = vmatprep.subr.mxu0 0.0
        %419 = vmatpush1.msra.mxu0 0.0
        %420 = vmatprep.subr.mxu0 0.0
        %421 = vmatpush1.msra.mxu0 0.0
        %422 = vmatprep.subr.mxu0 0.0
        %423 = vmatpush1.msra.mxu0 0.0
        %424 = vmatprep.subr.mxu0 0.0
        %425 = vmatpush1.msra.mxu0 0.0
        %426 = vmatprep.subr.mxu0 0.0
        %427 = vmatpush1.msra.mxu0 0.0
        %428 = vmatprep.subr.mxu0 0.0
        %429 = vmatpush1.msra.mxu0 0.0
        %430 = vmatprep.subr.mxu0 0.0
        %431 = vmatpush1.msra.mxu0 0.0
        %432 = vmatprep.subr.mxu0 0.0
        %433 = vmatpush1.msra.mxu0 0.0
        %434 = vmatprep.subr.mxu0 0.0
        %435 = vmatpush1.msra.mxu0 0.0
        %436 = vmatprep.subr.mxu0 0.0
        %437 = vmatpush1.msra.mxu0 0.0
        %438 = vmatprep.subr.mxu0 0.0
        %439 = vmatpush1.msra.mxu0 0.0
        %440 = vmatprep.subr.mxu0 0.0
        %441 = vmatpush1.msra.mxu0 0.0
        %442 = vmatprep.subr.mxu0 0.0
        %443 = vmatpush1.msra.mxu0 0.0
        %444 = vmatprep.subr.mxu0 0.0
        %445 = vmatpush1.msra.mxu0 0.0
        %446 = vmatprep.subr.mxu0 0.0
        %447 = vmatpush1.msra.mxu0 0.0
        %448 = vmatprep.subr.mxu0 0.0
        %449 = vmatpush1.msra.mxu0 0.0
        %450 = vmatprep.subr.mxu0 0.0
        %451 = vmatpush1.msra.mxu0 0.0
        %452 = vmatprep.subr.mxu0 0.0
        %453 = vmatpush1.msra.mxu0 0.0
        %454 = vmatprep.subr.mxu0 0.0
        %455 = vmatpush1.msra.mxu0 0.0
        %456 = vmatprep.subr.mxu0 0.0
        %457 = vmatpush1.msra.mxu0 0.0
        %458 = vmatprep.subr.mxu0 0.0
        %459 = vmatpush1.msra.mxu0 0.0
        %460 = vmatprep.subr.mxu0 0.0
        %461 = vmatpush1.msra.mxu0 0.0
        %462 = vmatprep.subr.mxu0 0.0
        %463 = vmatpush1.msra.mxu0 0.0
        %464 = vmatprep.subr.mxu0 0.0
        %465 = vmatpush1.msra.mxu0 0.0
        %466 = vmatprep.subr.mxu0 0.0
        %467 = vmatpush1.msra.mxu0 0.0
        %468 = vmatprep.subr.mxu0 0.0
        %469 = vmatpush1.msra.mxu0 0.0
        %470 = vmatprep.subr.mxu0 0.0
        %471 = vmatpush1.msra.mxu0 0.0
        %472 = vmatprep.subr.mxu0 0.0
        %473 = vmatpush1.msra.mxu0 0.0
        %474 = vmatprep.subr.mxu0 0.0
        %475 = vmatpush1.msra.mxu0 0.0
        %476 = vmatprep.subr.mxu0 0.0
        %477 = vmatpush1.msra.mxu0 0.0
        %478 = vmatprep.subr.mxu0 0.0
        %479 = vmatpush1.msra.mxu0 0.0
        %480 = vmatprep.mubr.f32.mxu0 0.0
        %481 = vmatmul.mubr.f32.gmra.mrb[0].mxu0 %v414
        %v482 = vpop.f32.mrb[0].mxu0
        %v483 = vadd.f32 0.0, %v482
        %v484 = vpop.f32.mrb[0].mxu0
        %485 = vdwg.mxu0
        %v486 = vld [vmem:[#allocation4] sm:$0x1]
        %488 = vset.pattern.permute.xlu0 0
        %489 = vperm.xlu0 %488, %v391
        %v490 = vpop.permute.xlu0 %489
        %v492 = vlaneseq
        %v493 = vshrl.u32 %v492, 7
        %v494 = vsub.s32 0, %v493
        %v495 = vrot.slane %v490, %v494
        %v496 = vmul.f32 %v495, %v486
        %v497 = vadd.f32 %v496, %v483
        %vm498 = vcmask 253952
        %499 = vst.msk [vmem:[#allocation4] sm:$0x1] %vm498, %v497
        %500 = vst.msk [vmem:[#allocation2] sm:$0x1] %vm410, %v388
        // Predicated region
        $region45: #{tpu_custom_call.1} parent=35 // pred_check
          %p501 = pneg %p280
        $region46: #{tpu_custom_call.1} parent=35 // pred_check_branch
          %503 = sbr.rel (%p501) target = $region48
        $region47: #{tpu_custom_call.1} parent=35 // pred_region
          %v504 = vld [vmem:[#allocation3] sm:$0x1]
          %v505 = vrcp.pop %v504
          %v506 = vmul.f32 %v504, %v505
          %v507 = vsub.f32 2.0, %v506
          %v508 = vmul.f32 %v505, %v507
          %v509 = vld [vmem:[#allocation4] sm:$0x1]
          %511 = vset.pattern.permute.xlu0 0
          %512 = vperm.xlu0 %511, %v508
          %v513 = vpop.permute.xlu0 %512
          %v515 = vlaneseq
          %v516 = vshrl.u32 %v515, 7
          %v517 = vsub.s32 0, %v516
          %v518 = vrot.slane %v513, %v517
          %v519 = vmul.f32 %v509, %v518
          %520 = vst.msk [vmem:[%s267] sm:$0x1] %vm498, %v519
        $region48: #{tpu_custom_call.1} parent=35 // pred_fallthru
          _
        %s521 = sand.u32 %s149, 1
        %s522 = scalar_lea.sflag [#allocation7], %s521
        %s523 = sand.u32 %s149, 1
        %s524 = scalar_lea.vmem [#allocation8], %s523
        // Predicated region
        $region49: #{tpu_custom_call.1} parent=35 // pred_check
          %p525 = pneg %p159
        $region50: #{tpu_custom_call.1} parent=35 // pred_check_branch
          %527 = sbr.rel (%p525) target = $region52
        $region51: #{tpu_custom_call.1} parent=35 // pred_region
          %s529 = ssub.s32 16, 16
          %530 = vsyncadd %s522, %s529
          %s531 = smul.addr %s25, 16
          %s532 = scalar_lea.hbm %s4, %s531
          %s534 = sshll.u32 %s524, 4
          %s535 = int_to_ptr.vmem [resolvable:$true] %s534
          %537 = dma.vmem_to_hbm [thread:$0]  %s535, 16, %s532, %s522
        $region52: #{tpu_custom_call.1} parent=35 // pred_fallthru
          _
      $region36: #{tpu_custom_call.1} parent=5 // pred_fallthru
        _
      %p538 = scmp.le.s32.totalorder 2, %s16
      // Predicated region
      $region53: #{tpu_custom_call.1} parent=5 // pred_check
        %p539 = pneg %p538
      $region54: #{tpu_custom_call.1} parent=5 // pred_check_branch
        %541 = sbr.rel (%p539) target = $region56
      $region55: #{tpu_custom_call.1} parent=5 // pred_region
        %s542 = ssub.s32 %s16, 2
        // Predicated region
        $region57: #{tpu_custom_call.1} parent=55 // pred_check
          %p543 = pneg %p165
        $region58: #{tpu_custom_call.1} parent=55 // pred_check_branch
          %545 = sbr.rel (%p543) target = $region60
        $region59: #{tpu_custom_call.1} parent=55 // pred_region
          %s546 = sand.u32 %s150, 1
          %s547 = scalar_lea.sflag [#allocation7], %s546
          %s548 = sand.u32 %s150, 1
          %s549 = scalar_lea.vmem [#allocation8], %s548
          %550 = dma.done %s547, 16
        $region60: #{tpu_custom_call.1} parent=55 // pred_fallthru
          _
      $region56: #{tpu_custom_call.1} parent=5 // pred_fallthru
        _
    $region6: #{tpu_custom_call.1} parent=1 // loop_footer
      %s20 = sadd.s32 1, %s16
    $region7: #{tpu_custom_call.1} parent=1 // loop_footer_branch
      %15 = sbr.rel target = $region3
    $region8: #{tpu_custom_call.1} parent=1 // loop_exit
      _
    %551 = vsyncpa [#allocation6], 1
    %s552 = scalar_lea.sflag [#allocation6], 1
    %553 = vsyncpa %s552, 1
    %554 = vsyncpa [#allocation7], 1
    %s555 = scalar_lea.sflag [#allocation7], 1
    %556 = vsyncpa %s555, 1

</llo_original>
